<compile_context>
chip_gen: v7x
topology: tpu7x:2x2x1
jax: 0.10.0
libtpu: 0.0.40
codegen_flags: <defaults>
</compile_context>

<pallas_src>
import functools

import jax
import jax.numpy as jnp
from jax.experimental import pallas as pl
from jax.experimental.pallas import tpu as pltpu

# Live double-buffered input footprint budget: 3 inputs x 2 buffers per tile.
# 12 MiB keeps comfortable headroom under v5e's 16 MiB default scoped VMEM
# (v6e/v7x defaults are 32 MiB).
_VMEM_BUDGET_BYTES = 12 * 1024 * 1024


def _sublane_multiple(itemsize):
    # f32 packs 8 rows per vreg, bf16 packs 16, int8/fp8 pack 32.
    return max(8, 32 // max(int(itemsize), 1))


def _round_up(x, m):
    return ((x + m - 1) // m) * m


def _select_tile_b(B, D, itemsize):
    sub = _sublane_multiple(itemsize)
    # Byte-based cap: 3 inputs x double-buffer must fit the VMEM budget.
    rows_vmem = (_VMEM_BUDGET_BYTES // (6 * D * itemsize)) // sub * sub
    rows_vmem = max(sub, rows_vmem)
    tile_b = min(rows_vmem, _round_up(B, sub))
    # Keep at least 2 grid steps whenever the batch is splittable so the
    # "parallel" axis can be sharded across both v7x TensorCores.
    if B >= 2 * sub:
        tile_b = min(tile_b, _round_up((B + 1) // 2, sub))
    return tile_b
    # TODO(synk): for very large D, add an inner "arbitrary" grid axis over D
    # with a (tile_b, 1) f32 VMEM accumulator instead of shrinking tile_b.


def _triplet_loss_kernel(a_ref, p_ref, n_ref, o_ref, *, margin, tile_b,
                         total_b, ragged):
    a = a_ref[...].astype(jnp.float32)
    p = p_ref[...].astype(jnp.float32)
    n = n_ref[...].astype(jnp.float32)

    # dpos - dneg == sum((n - p) * (2a - p - n), axis=1)  (one mul, one reduce)
    prod = (n - p) * (2.0 * a - p - n)
    delta = jnp.sum(prod, axis=1, keepdims=True)           # (tile_b, 1)
    losses = jnp.maximum(delta + margin, 0.0)               # relu

    def store(vals):
        col = jnp.sum(vals, axis=0, keepdims=True)          # (1, 1) partial
        # Lane-dense (8, 128) store: value replicated across the block; the
        # wrapper reads element [tile, 0, 0].
        o_ref[0] = jnp.broadcast_to(col, o_ref.shape[1:])

    if ragged:
        i = pl.program_id(0)
        last = pl.num_programs(0) - 1

        @pl.when(i != last)
        def _():
            store(losses)

        @pl.when(i == last)
        def _():
            # Edge tile extends past the batch: out-of-bounds rows hold
            # unspecified data; zero them (mask applied AFTER the relu, and
            # jnp.where does not propagate NaN/Inf from the masked branch).
            row = jax.lax.broadcasted_iota(jnp.int32, losses.shape, 0) \
                + i * tile_b
            store(jnp.where(row < total_b, losses, 0.0))
    else:
        store(losses)


def triplet_loss(anchor, positive, negative, margin=1.0, tile_b=None):
    """Pallas TripletLoss forward. Inputs: (B, D). Returns scalar float32."""
    B, D = anchor.shape
    itemsize = jnp.dtype(anchor.dtype).itemsize
    sub = _sublane_multiple(itemsize)

    if tile_b is None:
        tile_b = _select_tile_b(B, D, itemsize)
    else:
        tile_b = max(sub, _round_up(int(tile_b), sub))

    num_tiles = -(-B // tile_b)
    ragged = (B % tile_b) != 0

    kernel = functools.partial(
        _triplet_loss_kernel,
        margin=float(margin),
        tile_b=tile_b,
        total_b=B,
        ragged=ragged,
    )

    in_spec = pl.BlockSpec((tile_b, D), lambda i: (i, 0))
    partials = pl.pallas_call(
        kernel,
        out_shape=jax.ShapeDtypeStruct((num_tiles, 8, 128), jnp.float32),
        grid_spec=pltpu.PrefetchScalarGridSpec(
            num_scalar_prefetch=0,
            grid=(num_tiles,),
            in_specs=[in_spec, in_spec, in_spec],
            out_specs=pl.BlockSpec((1, 8, 128), lambda i: (i, 0, 0)),
        ),
        compiler_params=pltpu.CompilerParams(
            # Each tile writes its own independent partial -> no cross-step
            # carry, so the batch axis can shard across TensorCores (v7x).
            dimension_semantics=("parallel",),
        ),
    )(anchor, positive, negative)

    # Tiny cross-tile reduction + mean in the wrapper.
    return jnp.sum(partials[:, 0, 0]) / jnp.float32(B)


def triplet_loss_ref(anchor, positive, negative, margin=1.0):
    a = anchor.astype(jnp.float32)
    p = positive.astype(jnp.float32)
    n = negative.astype(jnp.float32)
    dp = jnp.sum((a - p) ** 2, axis=1)
    dn = jnp.sum((a - n) ** 2, axis=1)
    return jnp.mean(jnp.maximum(dp - dn + margin, 0.0))


if __name__ == "__main__":
    keys = jax.random.split(jax.random.PRNGKey(0), 9)

    # Test 1: small f32 batch, auto tiling (splits into 2 tiles -> both v7x
    # TensorCores get work even for a small batch).
    B, D = 64, 128
    a1 = jax.random.normal(keys[0], (B, D), dtype=jnp.float32)
    p1 = jax.random.normal(keys[1], (B, D), dtype=jnp.float32)
    n1 = jax.random.normal(keys[2], (B, D), dtype=jnp.float32)
    out1 = jax.block_until_ready(triplet_loss(a1, p1, n1, margin=1.0))
    ref1 = triplet_loss_ref(a1, p1, n1, margin=1.0)
    assert jnp.allclose(out1, ref1, rtol=1e-5, atol=1e-5), (out1, ref1)

    # Test 2: ragged multi-tile path (explicit tile_b=96 over B=272 -> 3 tiles,
    # last one masked in-kernel; no jnp.pad HBM copies).
    B2, D2 = 272, 128
    a2 = jax.random.normal(keys[3], (B2, D2), dtype=jnp.float32)
    p2 = jax.random.normal(keys[4], (B2, D2), dtype=jnp.float32)
    n2 = jax.random.normal(keys[5], (B2, D2), dtype=jnp.float32)
    out2 = jax.block_until_ready(triplet_loss(a2, p2, n2, margin=1.0, tile_b=96))
    ref2 = triplet_loss_ref(a2, p2, n2, margin=1.0)
    assert jnp.allclose(out2, ref2, rtol=1e-5, atol=1e-5), (out2, ref2)

    # Test 3: native bf16 inputs (half the HBM bytes), f32 accumulation in the
    # kernel; auto tiling picks bf16-packed (16-row-aligned) ragged tiles.
    B3, D3 = 50, 64
    a3 = jax.random.normal(keys[6], (B3, D3), dtype=jnp.bfloat16)
    p3 = jax.random.normal(keys[7], (B3, D3), dtype=jnp.bfloat16)
    n3 = jax.random.normal(keys[8], (B3, D3), dtype=jnp.bfloat16)
    out3 = jax.block_until_ready(triplet_loss(a3, p3, n3, margin=0.5))
    ref3 = triplet_loss_ref(a3, p3, n3, margin=0.5)
    assert jnp.allclose(out3, ref3, rtol=1e-4, atol=1e-4), (out3, ref3)

    print("KERNEL_OK")
</pallas_src>

<mosaic_0001>
module attributes {stable_mosaic.version = 11 : i64} {
  func.func @_triplet_loss_kernel(%arg0: i32, %arg1: memref<32x128xf32, #tpu.memory_space<vmem>>, %arg2: memref<32x128xf32, #tpu.memory_space<vmem>>, %arg3: memref<32x128xf32, #tpu.memory_space<vmem>>, %arg4: memref<1x8x128xf32, #tpu.memory_space<vmem>>) attributes {dimension_semantics = [#tpu.dimension_semantics<parallel>], iteration_bounds = array<i64: 2>, scalar_prefetch = 0 : i64, scratch_operands = 0 : i64, tpu.core_type = #tpu.core_type<tc>, window_params = [{transform_indices = @transform_0, window_bounds = array<i64: 32, 128>}, {transform_indices = @transform_1, window_bounds = array<i64: 32, 128>}, {transform_indices = @transform_2, window_bounds = array<i64: 32, 128>}, {transform_indices = @transform_3, window_bounds = array<i64: 1, 8, 128>}]} {
    %c0 = arith.constant 0 : index
    %c0_0 = arith.constant 0 : index
    %0 = vector.load %arg1[%c0, %c0_0] : memref<32x128xf32, #tpu.memory_space<vmem>>, vector<32x128xf32>
    %c0_1 = arith.constant 0 : index
    %c0_2 = arith.constant 0 : index
    %1 = vector.load %arg2[%c0_1, %c0_2] : memref<32x128xf32, #tpu.memory_space<vmem>>, vector<32x128xf32>
    %c0_3 = arith.constant 0 : index
    %c0_4 = arith.constant 0 : index
    %2 = vector.load %arg3[%c0_3, %c0_4] : memref<32x128xf32, #tpu.memory_space<vmem>>, vector<32x128xf32>
    %3 = arith.subf %2, %1 : vector<32x128xf32>
    %cst = arith.constant 2.000000e+00 : f32
    %4 = vector.broadcast %cst : f32 to vector<32x128xf32>
    %5 = arith.mulf %4, %0 : vector<32x128xf32>
    %6 = arith.subf %5, %1 : vector<32x128xf32>
    %7 = arith.subf %6, %2 : vector<32x128xf32>
    %8 = arith.mulf %3, %7 : vector<32x128xf32>
    %cst_5 = arith.constant dense<0.000000e+00> : vector<32xf32>
    %9 = vector.multi_reduction <add>, %8, %cst_5 [1] : vector<32x128xf32> to vector<32xf32>
    %10 = vector.shape_cast %9 : vector<32xf32> to vector<32x1xf32>
    %cst_6 = arith.constant 1.000000e+00 : f32
    %11 = vector.broadcast %cst_6 : f32 to vector<32x1xf32>
    %12 = arith.addf %10, %11 : vector<32x1xf32>
    %cst_7 = arith.constant 0.000000e+00 : f32
    %13 = vector.broadcast %cst_7 : f32 to vector<32x1xf32>
    %14 = arith.maximumf %12, %13 : vector<32x1xf32>
    %cst_8 = arith.constant dense<0.000000e+00> : vector<1xf32>
    %15 = vector.multi_reduction <add>, %14, %cst_8 [0] : vector<32x1xf32> to vector<1xf32>
    %16 = vector.shape_cast %15 : vector<1xf32> to vector<1x1xf32>
    %17 = vector.shape_cast %16 : vector<1x1xf32> to vector<1x1xf32>
    %18 = vector.broadcast %17 : vector<1x1xf32> to vector<8x128xf32>
    %c0_9 = arith.constant 0 : index
    %c0_10 = arith.constant 0 : index
    %c0_11 = arith.constant 0 : index
    %19 = vector.load %arg4[%c0_9, %c0_10, %c0_11] : memref<1x8x128xf32, #tpu.memory_space<vmem>>, vector<1x8x128xf32>
    %20 = vector.shape_cast %19 : vector<1x8x128xf32> to vector<8x128xf32>
    %21 = vector.shape_cast %18 : vector<8x128xf32> to vector<1x8x128xf32>
    tpu.vector_store %arg4[%c0_9, %c0_10, %c0_11], %21 {strides = array<i32>} : memref<1x8x128xf32, #tpu.memory_space<vmem>>, vector<1x8x128xf32>,
    return
  }
  func.func @transform_0(%arg0: i32) -> (i32, i32) {
    %c0_i32 = arith.constant 0 : i32
    %c0_i32_0 = arith.constant 0 : i32
    return %arg0, %c0_i32 : i32, i32
  }
  func.func @transform_1(%arg0: i32) -> (i32, i32) {
    %c0_i32 = arith.constant 0 : i32
    %c0_i32_0 = arith.constant 0 : i32
    return %arg0, %c0_i32 : i32, i32
  }
  func.func @transform_2(%arg0: i32) -> (i32, i32) {
    %c0_i32 = arith.constant 0 : i32
    %c0_i32_0 = arith.constant 0 : i32
    return %arg0, %c0_i32 : i32, i32
  }
  func.func @transform_3(%arg0: i32) -> (i32, i32, i32) {
    %c0_i32 = arith.constant 0 : i32
    %c0_i32_0 = arith.constant 0 : i32
    %c0_i32_1 = arith.constant 0 : i32
    return %arg0, %c0_i32, %c0_i32_0 : i32, i32, i32
  }
}

</mosaic_0001>

<llo_original>
// kernel: tpu_custom_call.1
$region0: #{tpu_custom_call.1}
  #allocation0 [shape = 'u32[]', space=smem, size = 0x4, offset = 0x4, fixed_abs, tag = 'smem constant byte address 0x4 - core index']
  #allocation1 [shape = 'u32[144,128]{1,0:T(1,128)}', space=vmem, size = 0x12000, scoped, tag = 'internal scratch']
  %s0 = inlined_call_operand.hbm [shape: f32[64,128], index: 0, kind: input, shape index: {}]
  %s1 = inlined_call_operand.hbm [shape: f32[64,128], index: 1, kind: input, shape index: {}]
  %s2 = inlined_call_operand.hbm [shape: f32[64,128], index: 2, kind: input, shape index: {}]
  %s3 = inlined_call_operand.hbm [shape: f32[2,8,128], index: 3, kind: output, shape index: {}]
  %s4 = sld [smem:[#allocation0]]
  $region57: #{tpu_custom_call.1} parent=0
    _
  %s6 = ssub.s32 1, %s4
  %s7 = scalar_select 0, %s6, %s4
  $region1: #{tpu_custom_call.1} parent=0
    #allocation2 [shape = 'u8[32768]{0}', space=vmem, size = 0x8000, scoped, tag = 'input window, operand 0']
    #allocation3 [shape = 's32[2]{0}', space=sflag, size = 0x8, scoped, tag = 'scoped memory for tpu_custom_call.1']
    #allocation4 [shape = 's32[2]{0}', space=sflag, size = 0x8, scoped, tag = 'scoped memory for tpu_custom_call.1']
    #allocation5 [shape = 'u8[32768]{0}', space=vmem, size = 0x8000, scoped, tag = 'input window, operand 1']
    #allocation6 [shape = 's32[2]{0}', space=sflag, size = 0x8, scoped, tag = 'scoped memory for tpu_custom_call.1']
    #allocation7 [shape = 'u8[32768]{0}', space=vmem, size = 0x8000, scoped, tag = 'input window, operand 2']
    #allocation8 [shape = 'u8[8192]{0}', space=vmem, size = 0x2000, scoped, tag = 'output window, operand 0']
    %8 = vsyncpa [#allocation3], 0
    %s9 = scalar_lea.sflag [#allocation3], 1
    %10 = vsyncpa %s9, 0
    %11 = vsyncpa [#allocation6], 0
    %s12 = scalar_lea.sflag [#allocation6], 1
    %13 = vsyncpa %s12, 0
    %14 = vsyncpa [#allocation4], 0
    %s15 = scalar_lea.sflag [#allocation4], 1
    %16 = vsyncpa %s15, 0
    loop: start=0, step=1, limit=4
    $region2: #{tpu_custom_call.1} parent=1 // loop_pre_header
      _
    $region3: #{tpu_custom_call.1} parent=1 // loop_header
      %s18 = sphi 0, %s22
      %p19 = scmp.ge.s32.totalorder %s18, 4
      %s28 = sphi 0, %s30
      %s31 = sphi 0, %s28
      %s32 = sphi 0, %s31
      %s48 = sphi 0, %s32
      %s54 = sphi 0, %s56
      %s57 = sphi 0, %s54
      %s58 = sphi 0, %s57
      %s74 = sphi 0, %s58
      %s80 = sphi 0, %s82
      %s83 = sphi 0, %s80
      %s84 = sphi 0, %s83
      %s100 = sphi 0, %s84
      %s106 = sphi 0, %s108
      %s109 = sphi 0, %s106
      %s110 = sphi 0, %s109
      %s126 = sphi 0, %s110
    $region4: #{tpu_custom_call.1} parent=1 // loop_header_branch
      %21 = sbr.rel (%p19) target = $region8
    $region5: #{tpu_custom_call.1} parent=1 // loop_body
      %s23 = ssub.s32 %s18, 1
      %s24 = ssub.s32 %s18, 2
      %s25 = sadd.s32 %s18, 1
      %s26 = ssub.s32 %s18, %s25
      %p27 = scmp.eq.s32.totalorder %s26, 0
      %s29 = sadd.s32 %s28, 1
      %s30 = scalar_select %p27, %s28, %s29
      %p33 = pneg %p27
      %p34 = scmp.eq.s32.totalorder %s18, 1
      %p35 = por %p33, %p34
      %p36 = scmp.ne.s32.totalorder %s28, %s31
      %p37 = scmp.eq.s32.totalorder %s18, 0
      %p38 = por %p36, %p37
      %p39 = scmp.ne.s32.totalorder %s28, %s31
      %p40 = scmp.eq.s32.totalorder %s23, 1
      %p41 = por %p39, %p40
      %p42 = scmp.ne.s32.totalorder %s31, %s32
      %p43 = scmp.eq.s32.totalorder %s23, 0
      %p44 = por %p42, %p43
      %p45 = scmp.ne.s32.totalorder %s31, %s32
      %p46 = scmp.eq.s32.totalorder %s24, 1
      %p47 = por %p45, %p46
      %p49 = scmp.ne.s32.totalorder %s32, %s48
      %p50 = scmp.eq.s32.totalorder %s24, 0
      %p51 = por %p49, %p50
      %s52 = ssub.s32 %s18, %s25
      %p53 = scmp.eq.s32.totalorder %s52, 0
      %s55 = sadd.s32 %s54, 1
      %s56 = scalar_select %p53, %s54, %s55
      %p59 = pneg %p53
      %p60 = scmp.eq.s32.totalorder %s18, 1
      %p61 = por %p59, %p60
      %p62 = scmp.ne.s32.totalorder %s54, %s57
      %p63 = scmp.eq.s32.totalorder %s18, 0
      %p64 = por %p62, %p63
      %p65 = scmp.ne.s32.totalorder %s54, %s57
      %p66 = scmp.eq.s32.totalorder %s23, 1
      %p67 = por %p65, %p66
      %p68 = scmp.ne.s32.totalorder %s57, %s58
      %p69 = scmp.eq.s32.totalorder %s23, 0
      %p70 = por %p68, %p69
      %p71 = scmp.ne.s32.totalorder %s57, %s58
      %p72 = scmp.eq.s32.totalorder %s24, 1
      %p73 = por %p71, %p72
      %p75 = scmp.ne.s32.totalorder %s58, %s74
      %p76 = scmp.eq.s32.totalorder %s24, 0
      %p77 = por %p75, %p76
      %s78 = ssub.s32 %s18, %s25
      %p79 = scmp.eq.s32.totalorder %s78, 0
      %s81 = sadd.s32 %s80, 1
      %s82 = scalar_select %p79, %s80, %s81
      %p85 = pneg %p79
      %p86 = scmp.eq.s32.totalorder %s18, 1
      %p87 = por %p85, %p86
      %p88 = scmp.ne.s32.totalorder %s80, %s83
      %p89 = scmp.eq.s32.totalorder %s18, 0
      %p90 = por %p88, %p89
      %p91 = scmp.ne.s32.totalorder %s80, %s83
      %p92 = scmp.eq.s32.totalorder %s23, 1
      %p93 = por %p91, %p92
      %p94 = scmp.ne.s32.totalorder %s83, %s84
      %p95 = scmp.eq.s32.totalorder %s23, 0
      %p96 = por %p94, %p95
      %p97 = scmp.ne.s32.totalorder %s83, %s84
      %p98 = scmp.eq.s32.totalorder %s24, 1
      %p99 = por %p97, %p98
      %p101 = scmp.ne.s32.totalorder %s84, %s100
      %p102 = scmp.eq.s32.totalorder %s24, 0
      %p103 = por %p101, %p102
      %s104 = ssub.s32 %s18, %s25
      %p105 = scmp.eq.s32.totalorder %s104, 0
      %s107 = sadd.s32 %s106, 1
      %s108 = scalar_select %p105, %s106, %s107
      %p111 = pneg %p105
      %p112 = scmp.eq.s32.totalorder %s18, 1
      %p113 = por %p111, %p112
      %p114 = scmp.ne.s32.totalorder %s106, %s109
      %p115 = scmp.eq.s32.totalorder %s18, 0
      %p116 = por %p114, %p115
      %p117 = scmp.ne.s32.totalorder %s106, %s109
      %p118 = scmp.eq.s32.totalorder %s23, 1
      %p119 = por %p117, %p118
      %p120 = scmp.ne.s32.totalorder %s109, %s110
      %p121 = scmp.eq.s32.totalorder %s23, 0
      %p122 = por %p120, %p121
      %p123 = scmp.ne.s32.totalorder %s109, %s110
      %p124 = scmp.eq.s32.totalorder %s24, 1
      %p125 = por %p123, %p124
      %p127 = scmp.ne.s32.totalorder %s110, %s126
      %p128 = scmp.eq.s32.totalorder %s24, 0
      %p129 = por %p127, %p128
      %p130 = scmp.le.s32.totalorder 1, %s18
      %p131 = scmp.lt.s32.totalorder %s18, 3
      %p132 = pnand %p130, %p131
      %p133 = pneg %p132
      // Predicated region
      $region9: #{tpu_custom_call.1} parent=5 // pred_check
        _
      $region10: #{tpu_custom_call.1} parent=5 // pred_check_branch
        %135 = sbr.rel (%p132) target = $region12
      $region11: #{tpu_custom_call.1} parent=5 // pred_region
        %s136 = ssub.s32 %s18, 1
      $region12: #{tpu_custom_call.1} parent=5 // pred_fallthru
        _
      %p137 = scmp.lt.s32.totalorder %s18, 2
      // Predicated region
      $region13: #{tpu_custom_call.1} parent=5 // pred_check
        %p138 = pneg %p137
      $region14: #{tpu_custom_call.1} parent=5 // pred_check_branch
        %140 = sbr.rel (%p138) target = $region16
      $region15: #{tpu_custom_call.1} parent=5 // pred_region
        // Predicated region
        $region17: #{tpu_custom_call.1} parent=15 // pred_check
          %p141 = pneg %p38
        $region18: #{tpu_custom_call.1} parent=15 // pred_check_branch
          %143 = sbr.rel (%p141) target = $region20
        $region19: #{tpu_custom_call.1} parent=15 // pred_region
          %s144 = sand.u32 %s28, 1
          %s145 = scalar_lea.sflag [#allocation3], %s144
          %s146 = sand.u32 %s28, 1
          %s147 = smul.addr %s146, 32
          %s148 = scalar_lea.vmem [#allocation2], %s147
          %s149 = smul.u32 4, %s18
          %s151 = ssub.s32 512, 512
          %152 = vsyncadd %s145, %s151
          %s153 = smul.addr %s149, 128
          %s154 = scalar_lea.hbm %s0, %s153
          %s155 = sshll.u32 %s148, 4
          %s156 = int_to_ptr.vmem [resolvable:$true] %s155
          %161 = dma.hbm_to_vmem [thread:$0]  %s154, 512, %s156, %s145, 128, 128, 8
        $region20: #{tpu_custom_call.1} parent=15 // pred_fallthru
          _
        // Predicated region
        $region21: #{tpu_custom_call.1} parent=15 // pred_check
          %p162 = pneg %p64
        $region22: #{tpu_custom_call.1} parent=15 // pred_check_branch
          %164 = sbr.rel (%p162) target = $region24
        $region23: #{tpu_custom_call.1} parent=15 // pred_region
          %s165 = sand.u32 %s18, 1
          %s166 = scalar_lea.sflag [#allocation6], %s165
          %s167 = sand.u32 %s54, 1
          %s168 = smul.addr %s167, 32
          %s169 = scalar_lea.vmem [#allocation5], %s168
          %s170 = smul.u32 4, %s18
          %s172 = ssub.s32 512, 512
          %173 = vsyncadd %s166, %s172
          %s174 = smul.addr %s170, 128
          %s175 = scalar_lea.hbm %s1, %s174
          %s176 = sshll.u32 %s169, 4
          %s177 = int_to_ptr.vmem [resolvable:$true] %s176
          %182 = dma.hbm_to_vmem [thread:$0]  %s175, 512, %s177, %s166, 128, 128, 8
        $region24: #{tpu_custom_call.1} parent=15 // pred_fallthru
          _
        // Predicated region
        $region25: #{tpu_custom_call.1} parent=15 // pred_check
          %p183 = pneg %p90
        $region26: #{tpu_custom_call.1} parent=15 // pred_check_branch
          %185 = sbr.rel (%p183) target = $region28
        $region27: #{tpu_custom_call.1} parent=15 // pred_region
          %s186 = sand.u32 %s18, 1
          %s187 = scalar_lea.sflag [#allocation6], %s186
          %s188 = sand.u32 %s80, 1
          %s189 = smul.addr %s188, 32
          %s190 = scalar_lea.vmem [#allocation7], %s189
          %s191 = smul.u32 4, %s18
          %s193 = ssub.s32 512, 512
          %194 = vsyncadd %s187, %s193
          %s195 = smul.addr %s191, 128
          %s196 = scalar_lea.hbm %s2, %s195
          %s197 = sshll.u32 %s190, 4
          %s198 = int_to_ptr.vmem [resolvable:$true] %s197
          %203 = dma.hbm_to_vmem [thread:$0]  %s196, 512, %s198, %s187, 128, 128, 8
        $region28: #{tpu_custom_call.1} parent=15 // pred_fallthru
          _
      $region16: #{tpu_custom_call.1} parent=5 // pred_fallthru
        _
      %p204 = scmp.le.s32.totalorder 1, %s18
      %p205 = scmp.lt.s32.totalorder %s18, 3
      %p206 = pnand %p204, %p205
      %p207 = pneg %p206
      // Predicated region
      $region29: #{tpu_custom_call.1} parent=5 // pred_check
        _
      $region30: #{tpu_custom_call.1} parent=5 // pred_check_branch
        %209 = sbr.rel (%p206) target = $region32
      $region31: #{tpu_custom_call.1} parent=5 // pred_region
        %s210 = ssub.s32 %s18, 1
        %s211 = sand.u32 %s31, 1
        %s212 = scalar_lea.sflag [#allocation3], %s211
        %s213 = sand.u32 %s31, 1
        %s214 = smul.addr %s213, 32
        %s215 = scalar_lea.vmem [#allocation2], %s214
        // Predicated region
        $region33: #{tpu_custom_call.1} parent=31 // pred_check
          %p216 = pneg %p44
        $region34: #{tpu_custom_call.1} parent=31 // pred_check_branch
          %218 = sbr.rel (%p216) target = $region36
        $region35: #{tpu_custom_call.1} parent=31 // pred_region
          %219 = dma.done %s212, 512
        $region36: #{tpu_custom_call.1} parent=31 // pred_fallthru
          _
        %s220 = sand.u32 %s23, 1
        %s221 = scalar_lea.sflag [#allocation6], %s220
        %s222 = sand.u32 %s57, 1
        %s223 = smul.addr %s222, 32
        %s224 = scalar_lea.vmem [#allocation5], %s223
        // Predicated region
        $region37: #{tpu_custom_call.1} parent=31 // pred_check
          %p225 = pneg %p70
        $region38: #{tpu_custom_call.1} parent=31 // pred_check_branch
          %227 = sbr.rel (%p225) target = $region40
        $region39: #{tpu_custom_call.1} parent=31 // pred_region
          %228 = dma.done %s221, 512
        $region40: #{tpu_custom_call.1} parent=31 // pred_fallthru
          _
        %s229 = sand.u32 %s23, 1
        %s230 = scalar_lea.sflag [#allocation6], %s229
        %s231 = sand.u32 %s83, 1
        %s232 = smul.addr %s231, 32
        %s233 = scalar_lea.vmem [#allocation7], %s232
        // Predicated region
        $region41: #{tpu_custom_call.1} parent=31 // pred_check
          %p234 = pneg %p96
        $region42: #{tpu_custom_call.1} parent=31 // pred_check_branch
          %236 = sbr.rel (%p234) target = $region44
        $region43: #{tpu_custom_call.1} parent=31 // pred_region
          %237 = dma.done %s230, 512
        $region44: #{tpu_custom_call.1} parent=31 // pred_fallthru
          _
        %s238 = sand.u32 %s31, 1
        %s239 = scalar_lea.sflag [#allocation3], %s238
        %s240 = sand.u32 %s31, 1
        %s241 = smul.addr %s240, 32
        %s242 = scalar_lea.vmem [#allocation2], %s241
        %p243 = pneg %p44
        %p244 = pneg %p41
        %s245 = sand.u32 %s23, 1
        %s246 = scalar_lea.sflag [#allocation6], %s245
        %s247 = sand.u32 %s57, 1
        %s248 = smul.addr %s247, 32
        %s249 = scalar_lea.vmem [#allocation5], %s248
        %p250 = pneg %p70
        %p251 = pneg %p67
        %s252 = sand.u32 %s23, 1
        %s253 = scalar_lea.sflag [#allocation6], %s252
        %s254 = sand.u32 %s83, 1
        %s255 = smul.addr %s254, 32
        %s256 = scalar_lea.vmem [#allocation7], %s255
        %p257 = pneg %p96
        %p258 = pneg %p93
        %p259 = pneg %p122
        %p260 = pneg %p119
        %s261 = sand.u32 %s109, 1
        %s262 = scalar_lea.sflag [#allocation4], %s261
        %s263 = sand.u32 %s109, 1
        %s264 = smul.addr %s263, 8
        %s265 = scalar_lea.vmem [#allocation8], %s264
        %s266 = smul.u32 4, %s23
        %s267 = smul.u32 4, %s23
        %s268 = smul.u32 4, %s23
        %v269 = vld [vmem:[%s215] sm:$0xff]
        %v270 = vld [vmem:[%s215 + $0x8] sm:$0xff]
        %v271 = vld [vmem:[%s215 + $0x10] sm:$0xff]
        %v272 = vld [vmem:[%s215 + $0x18] sm:$0xff]
        %v273 = vld [vmem:[%s224] sm:$0xff]
        %v274 = vld [vmem:[%s224 + $0x8] sm:$0xff]
        %v275 = vld [vmem:[%s224 + $0x10] sm:$0xff]
        %v276 = vld [vmem:[%s224 + $0x18] sm:$0xff]
        %v277 = vld [vmem:[%s233] sm:$0xff]
        %v278 = vld [vmem:[%s233 + $0x8] sm:$0xff]
        %v279 = vld [vmem:[%s233 + $0x10] sm:$0xff]
        %v280 = vld [vmem:[%s233 + $0x18] sm:$0xff]
        %v281 = vsub.f32 %v277, %v273
        %v282 = vsub.f32 %v278, %v274
        %v283 = vsub.f32 %v279, %v275
        %v284 = vsub.f32 %v280, %v276
        %v285 = vmul.f32 %v269, 2.0
        %v286 = vmul.f32 %v270, 2.0
        %v287 = vmul.f32 %v271, 2.0
        %v288 = vmul.f32 %v272, 2.0
        %v289 = vsub.f32 %v285, %v273
        %v290 = vsub.f32 %v286, %v274
        %v291 = vsub.f32 %v287, %v275
        %v292 = vsub.f32 %v288, %v276
        %v293 = vsub.f32 %v289, %v277
        %v294 = vsub.f32 %v290, %v278
        %v295 = vsub.f32 %v291, %v279
        %v296 = vsub.f32 %v292, %v280
        %v297 = vmul.f32 %v281, %v293
        %v298 = vmul.f32 %v282, %v294
        %v299 = vmul.f32 %v283, %v295
        %v300 = vmul.f32 %v284, %v296
        %301 = vadd.xlane.f32.xlu0 %v297
        %v302 = vpop.xlane.xlu0 %301
        %303 = vadd.xlane.f32.xlu0 %v298
        %v304 = vpop.xlane.xlu0 %303
        %305 = vadd.xlane.f32.xlu0 %v299
        %v306 = vpop.xlane.xlu0 %305
        %307 = vadd.xlane.f32.xlu0 %v300
        %v308 = vpop.xlane.xlu0 %307
        %v309 = vadd.f32 %v302, 1.0
        %v310 = vadd.f32 %v304, 1.0
        %v311 = vadd.f32 %v306, 1.0
        %v312 = vadd.f32 %v308, 1.0
        %v313 = vmax.f32 %v309, 0.0
        %v314 = vmax.f32 %v310, 0.0
        %v315 = vmax.f32 %v311, 0.0
        %v316 = vmax.f32 %v312, 0.0
        %v317 = vadd.f32 %v313, %v314
        %v318 = vadd.f32 %v317, %v315
        %v319 = vadd.f32 %v318, %v316
        %v320 = vrot.slane %v319, 4
        %v321 = vadd.f32 %v319, %v320
        %v322 = vrot.slane %v321, 2
        %v323 = vadd.f32 %v321, %v322
        %v324 = vrot.slane %v323, 1
        %v325 = vadd.f32 %v323, %v324
        %326 = vst [vmem:[%s265] sm:$0xff] %v325
        %s327 = sand.u32 %s109, 1
        %s328 = scalar_lea.sflag [#allocation4], %s327
        %s329 = sand.u32 %s109, 1
        %s330 = smul.addr %s329, 8
        %s331 = scalar_lea.vmem [#allocation8], %s330
        // Predicated region
        $region45: #{tpu_custom_call.1} parent=31 // pred_check
          %p332 = pneg %p119
        $region46: #{tpu_custom_call.1} parent=31 // pred_check_branch
          %334 = sbr.rel (%p332) target = $region48
        $region47: #{tpu_custom_call.1} parent=31 // pred_region
          %s336 = ssub.s32 128, 128
          %337 = vsyncadd %s328, %s336
          %s338 = smul.addr %s23, 128
          %s339 = scalar_lea.hbm %s3, %s338
          %s341 = sshll.u32 %s331, 4
          %s342 = int_to_ptr.vmem [resolvable:$true] %s341
          %344 = dma.vmem_to_hbm [thread:$0]  %s342, 128, %s339, %s328
        $region48: #{tpu_custom_call.1} parent=31 // pred_fallthru
          _
      $region32: #{tpu_custom_call.1} parent=5 // pred_fallthru
        _
      %p345 = scmp.le.s32.totalorder 2, %s18
      // Predicated region
      $region49: #{tpu_custom_call.1} parent=5 // pred_check
        %p346 = pneg %p345
      $region50: #{tpu_custom_call.1} parent=5 // pred_check_branch
        %348 = sbr.rel (%p346) target = $region52
      $region51: #{tpu_custom_call.1} parent=5 // pred_region
        %s349 = ssub.s32 %s18, 2
        // Predicated region
        $region53: #{tpu_custom_call.1} parent=51 // pred_check
          %p350 = pneg %p125
        $region54: #{tpu_custom_call.1} parent=51 // pred_check_branch
          %352 = sbr.rel (%p350) target = $region56
        $region55: #{tpu_custom_call.1} parent=51 // pred_region
          %s353 = sand.u32 %s110, 1
          %s354 = scalar_lea.sflag [#allocation4], %s353
          %s355 = sand.u32 %s110, 1
          %s356 = smul.addr %s355, 8
          %s357 = scalar_lea.vmem [#allocation8], %s356
          %358 = dma.done %s354, 128
        $region56: #{tpu_custom_call.1} parent=51 // pred_fallthru
          _
      $region52: #{tpu_custom_call.1} parent=5 // pred_fallthru
        _
    $region6: #{tpu_custom_call.1} parent=1 // loop_footer
      %s22 = sadd.s32 1, %s18
    $region7: #{tpu_custom_call.1} parent=1 // loop_footer_branch
      %17 = sbr.rel target = $region3
    $region8: #{tpu_custom_call.1} parent=1 // loop_exit
      _
    %359 = vsyncpa [#allocation3], 1
    %s360 = scalar_lea.sflag [#allocation3], 1
    %361 = vsyncpa %s360, 1
    %362 = vsyncpa [#allocation6], 1
    %s363 = scalar_lea.sflag [#allocation6], 1
    %364 = vsyncpa %s363, 1
    %365 = vsyncpa [#allocation4], 1
    %s366 = scalar_lea.sflag [#allocation4], 1
    %367 = vsyncpa %s366, 1

</llo_original>
